<compile_context>
chip_gen: v6e
topology: v6e:2x2x1
jax: 0.10.0
libtpu: 0.0.40
codegen_flags: <defaults>
</compile_context>

<pallas_src>
import jax
import jax.numpy as jnp
from jax.experimental import pallas as pl
from jax.experimental.pallas import tpu as pltpu


def _round_up(x, m):
    return ((x + m - 1) // m) * m


# ---------------------------------------------------------------------------
# Kernel A: two GCN layers in transposed layout.
#   h1^T = relu(W1^T X^T A_hat^T + b1^T)     [H, N_pad]
#   h2^T = relu(W2^T h1^T A_hat^T + b2^T)    [H, N_pad]  (bf16 output)
# ---------------------------------------------------------------------------
def gcn_kernel(a_hatT_ref, xT_ref, w1T_ref, b1T_ref, w2T_ref, b2T_ref, h2T_ref):
    f32 = jnp.float32
    bf16 = jnp.bfloat16
    a_hatT = a_hatT_ref[...]                                      # [Np, Np] bf16

    xw1T = jnp.dot(w1T_ref[...], xT_ref[...], preferred_element_type=f32)
    h1T = jnp.dot(xw1T.astype(bf16), a_hatT, preferred_element_type=f32)
    h1T = jnp.maximum(h1T + b1T_ref[...], 0.0)                    # [H, Np] f32

    xw2T = jnp.dot(w2T_ref[...], h1T.astype(bf16), preferred_element_type=f32)
    h2T = jnp.dot(xw2T.astype(bf16), a_hatT, preferred_element_type=f32)
    h2T_ref[...] = jnp.maximum(h2T + b2T_ref[...], 0.0).astype(h2T_ref.dtype)


# ---------------------------------------------------------------------------
# Kernel B: edge MLP, tiled over the (padded) edge axis.
#   x_src^T = h2^T S_row^T ; x_dst^T = h2^T S_col^T      [H, TE]
#   m1^T    = relu(Wm1_r^T x_src^T + Wm1_c^T x_dst^T + Wm1_e^T eattr^T + bm1^T)
#   logits  = sum_h (m1^T * wm2) + bm2                    [1, TE]  (lane-dense)
# ---------------------------------------------------------------------------
def edge_mlp_kernel(h2T_ref, s_rowT_ref, s_colT_ref, e_attrT_ref,
                    wm1_rT_ref, wm1_cT_ref, wm1_eT_ref, bm1T_ref,
                    wm2_ref, bm2_ref, out_ref):
    f32 = jnp.float32
    bf16 = jnp.bfloat16
    h2T = h2T_ref[...]                                            # [H, Np] bf16

    x_srcT = jnp.dot(h2T, s_rowT_ref[...], preferred_element_type=f32)  # [H, TE]
    x_dstT = jnp.dot(h2T, s_colT_ref[...], preferred_element_type=f32)  # [H, TE]

    m1T = (jnp.dot(wm1_rT_ref[...], x_srcT.astype(bf16), preferred_element_type=f32)
           + jnp.dot(wm1_cT_ref[...], x_dstT.astype(bf16), preferred_element_type=f32)
           + jnp.dot(wm1_eT_ref[...], e_attrT_ref[...], preferred_element_type=f32)
           + bm1T_ref[...])
    m1T = jnp.maximum(m1T, 0.0)                                   # [H, TE] f32

    # H -> 1 projection off the MXU: VPU multiply + sublane (XLU) reduction.
    out_ref[...] = jnp.sum(m1T * wm2_ref[...], axis=0, keepdims=True) + bm2_ref[...]


# ---------------------------------------------------------------------------
# Host-side glue.
# ---------------------------------------------------------------------------
def normalized_adjacency(edge_index, n):
    """PyG-style gcn_norm: D^-1/2 (A + remaining self loops) D^-1/2."""
    row, col = edge_index[0], edge_index[1]
    adj = jnp.zeros((n, n), jnp.float32).at[col, row].add(1.0)
    diag = jnp.diagonal(adj)
    adj = adj + jnp.diag(jnp.where(diag > 0.0, 0.0, 1.0))  # only add missing self loops
    deg = adj.sum(axis=1)
    dis = jnp.where(deg > 0, 1.0 / jnp.sqrt(deg), 0.0)
    return dis[:, None] * adj * dis[None, :]


def gnn_forward(x, edge_index, edge_attr, params):
    n, f = x.shape
    e = edge_index.shape[1]
    fe = edge_attr.shape[1]
    (w1, b1, w2, b2, wm1, bm1, wm2, bm2) = params
    hid = w1.shape[1]

    n_pad = _round_up(n, 128)
    e_pad = _round_up(e, 128)
    row, col = edge_index[0], edge_index[1]
    bf16 = jnp.bfloat16

    # --- build padded, transposed operands (wrapper-side layout plumbing) ---
    a_hat = normalized_adjacency(edge_index, n)
    a_hatT = jnp.zeros((n_pad, n_pad), jnp.float32).at[:n, :n].set(a_hat.T).astype(bf16)
    xT = jnp.zeros((f, n_pad), jnp.float32).at[:, :n].set(x.T).astype(bf16)

    s_rowT = jnp.zeros((n_pad, e_pad), jnp.float32).at[:n, :e].set(
        jax.nn.one_hot(row, n, dtype=jnp.float32).T).astype(bf16)
    s_colT = jnp.zeros((n_pad, e_pad), jnp.float32).at[:n, :e].set(
        jax.nn.one_hot(col, n, dtype=jnp.float32).T).astype(bf16)
    e_attrT = jnp.zeros((fe, e_pad), jnp.float32).at[:, :e].set(edge_attr.T)  # f32 (tiny)

    w1T = w1.T.astype(bf16)                      # [H, F]
    w2T = w2.T.astype(bf16)                      # [H, H]
    b1T = b1.reshape(hid, 1)                     # f32 [H, 1]
    b2T = b2.reshape(hid, 1)
    wm1_rT = wm1[:hid, :].T.astype(bf16)         # [H, H]
    wm1_cT = wm1[hid:2 * hid, :].T.astype(bf16)  # [H, H]
    wm1_eT = wm1[2 * hid:, :].T                  # f32 [H, Fe]
    bm1T = bm1.reshape(hid, 1)                   # f32
    wm2_c = wm2.reshape(hid, 1)                  # f32, used on VPU
    bm2_c = bm2.reshape(1, 1)                    # f32

    # --- kernel A: node embeddings (whole arrays in VMEM, single step) ------
    h2T = pl.pallas_call(
        gcn_kernel,
        out_shape=jax.ShapeDtypeStruct((hid, n_pad), bf16),
        in_specs=[pl.BlockSpec(memory_space=pltpu.MemorySpace.VMEM)] * 6,
        out_specs=pl.BlockSpec(memory_space=pltpu.MemorySpace.VMEM),
    )(a_hatT, xT, w1T, b1T, w2T, b2T)

    # --- kernel B: edge MLP, tiled over edges (parallel grid axis) ----------
    te = 512
    while e_pad % te:
        te //= 2            # e_pad is a multiple of 128, so te ends >= 128
    grid = (e_pad // te,)

    logits = pl.pallas_call(
        edge_mlp_kernel,
        out_shape=jax.ShapeDtypeStruct((1, e_pad), jnp.float32),
        grid=grid,
        in_specs=[
            pl.BlockSpec((hid, n_pad), lambda i: (0, 0)),   # h2^T (whole)
            pl.BlockSpec((n_pad, te), lambda i: (0, i)),    # S_row^T tile
            pl.BlockSpec((n_pad, te), lambda i: (0, i)),    # S_col^T tile
            pl.BlockSpec((fe, te), lambda i: (0, i)),       # edge_attr^T tile
            pl.BlockSpec((hid, hid), lambda i: (0, 0)),     # Wm1_r^T
            pl.BlockSpec((hid, hid), lambda i: (0, 0)),     # Wm1_c^T
            pl.BlockSpec((hid, fe), lambda i: (0, 0)),      # Wm1_e^T
            pl.BlockSpec((hid, 1), lambda i: (0, 0)),       # bm1^T
            pl.BlockSpec((hid, 1), lambda i: (0, 0)),       # wm2
            pl.BlockSpec((1, 1), lambda i: (0, 0)),         # bm2
        ],
        out_specs=pl.BlockSpec((1, te), lambda i: (0, i)),
        compiler_params=pltpu.CompilerParams(
            dimension_semantics=("parallel",)),
    )(h2T, s_rowT, s_colT, e_attrT,
      wm1_rT, wm1_cT, wm1_eT, bm1T, wm2_c, bm2_c)

    return logits[0, :e]          # lane-dense row -> [E]


def init_params(key, node_input_dim, edge_input_dim, hidden_dim):
    """Deterministic synthetic parameters (same shapes as the torch module)."""
    ks = jax.random.split(key, 8)

    def lin(k, fan_in, fan_out):
        scale = 1.0 / jnp.sqrt(jnp.float32(fan_in))
        return jax.random.uniform(k, (fan_in, fan_out), jnp.float32, -scale, scale)

    w1 = lin(ks[0], node_input_dim, hidden_dim)
    b1 = jax.random.uniform(ks[1], (1, hidden_dim), jnp.float32, -0.1, 0.1)
    w2 = lin(ks[2], hidden_dim, hidden_dim)
    b2 = jax.random.uniform(ks[3], (1, hidden_dim), jnp.float32, -0.1, 0.1)
    wm1 = lin(ks[4], hidden_dim * 2 + edge_input_dim, hidden_dim)
    bm1 = jax.random.uniform(ks[5], (1, hidden_dim), jnp.float32, -0.1, 0.1)
    wm2 = lin(ks[6], hidden_dim, 1)
    bm2 = jax.random.uniform(ks[7], (1, 1), jnp.float32, -0.1, 0.1)
    return (w1, b1, w2, b2, wm1, bm1, wm2, bm2)


def reference_forward(x, edge_index, edge_attr, params):
    """Pure-JAX f32 reference mirroring the torch module semantics."""
    n = x.shape[0]
    row, col = edge_index[0], edge_index[1]
    a_hat = normalized_adjacency(edge_index, n)
    (w1, b1, w2, b2, wm1, bm1, wm2, bm2) = params
    h = jax.nn.relu(a_hat @ (x @ w1) + b1)
    h = jax.nn.relu(a_hat @ (h @ w2) + b2)
    ef = jnp.concatenate([h[row], h[col], edge_attr], axis=1)
    m = jax.nn.relu(ef @ wm1 + bm1)
    return (m @ wm2 + bm2)[:, 0]


if __name__ == "__main__":
    key = jax.random.PRNGKey(0)
    k_x, k_ei, k_ea, k_p = jax.random.split(key, 4)

    # Small synthetic graph.
    num_nodes = 16
    num_edges = 32
    node_input_dim = 8
    edge_input_dim = 4
    hidden_dim = 32

    x = jax.random.normal(k_x, (num_nodes, node_input_dim), jnp.float32)
    edge_index = jax.random.randint(k_ei, (2, num_edges), 0, num_nodes, jnp.int32)
    edge_attr = jax.random.normal(k_ea, (num_edges, edge_input_dim), jnp.float32)
    params = init_params(k_p, node_input_dim, edge_input_dim, hidden_dim)

    out = gnn_forward(x, edge_index, edge_attr, params)
    out = jax.block_until_ready(out)

    ref = reference_forward(x, edge_index, edge_attr, params)
    assert out.shape == (num_edges,)
    # bf16 MXU operands (f32 accumulation) vs. the f32 reference -> relaxed tol.
    assert jnp.allclose(out, ref, atol=5e-2, rtol=5e-2), "mismatch vs reference"

    print("KERNEL_OK")
</pallas_src>

<mosaic_0001>
module attributes {stable_mosaic.version = 11 : i64} {
  func.func @gcn_kernel(%arg0: memref<128x128xbf16, #tpu.memory_space<vmem>>, %arg1: memref<8x128xbf16, #tpu.memory_space<vmem>>, %arg2: memref<32x8xbf16, #tpu.memory_space<vmem>>, %arg3: memref<32x1xf32, #tpu.memory_space<vmem>>, %arg4: memref<32x32xbf16, #tpu.memory_space<vmem>>, %arg5: memref<32x1xf32, #tpu.memory_space<vmem>>, %arg6: memref<32x128xbf16, #tpu.memory_space<vmem>>) attributes {dimension_semantics = [], scalar_prefetch = 0 : i64, scratch_operands = 0 : i64, tpu.core_type = #tpu.core_type<tc>} {
    %c0 = arith.constant 0 : index
    %c0_0 = arith.constant 0 : index
    %0 = vector.load %arg0[%c0, %c0_0] : memref<128x128xbf16, #tpu.memory_space<vmem>>, vector<128x128xbf16>
    %c0_1 = arith.constant 0 : index
    %c0_2 = arith.constant 0 : index
    %1 = vector.load %arg2[%c0_1, %c0_2] : memref<32x8xbf16, #tpu.memory_space<vmem>>, vector<32x8xbf16>
    %c0_3 = arith.constant 0 : index
    %c0_4 = arith.constant 0 : index
    %2 = vector.load %arg1[%c0_3, %c0_4] : memref<8x128xbf16, #tpu.memory_space<vmem>>, vector<8x128xbf16>
    %cst = arith.constant dense<0.000000e+00> : vector<32x128xf32>
    %3 = tpu.matmul %1, %2, %cst {dimension_numbers = #tpu.dot_dimension_numbers<[1], [0], [0], [1], [0, 0, 1, 1], [], []>} : vector<32x8xbf16>, vector<8x128xbf16>, vector<32x128xf32> -> vector<32x128xf32>
    %4 = arith.truncf %3 : vector<32x128xf32> to vector<32x128xbf16>
    %cst_5 = arith.constant dense<0.000000e+00> : vector<32x128xf32>
    %5 = tpu.matmul %4, %0, %cst_5 {dimension_numbers = #tpu.dot_dimension_numbers<[1], [0], [0], [1], [0, 0, 1, 1], [], []>} : vector<32x128xbf16>, vector<128x128xbf16>, vector<32x128xf32> -> vector<32x128xf32>
    %c0_6 = arith.constant 0 : index
    %c0_7 = arith.constant 0 : index
    %6 = vector.load %arg3[%c0_6, %c0_7] : memref<32x1xf32, #tpu.memory_space<vmem>>, vector<32x1xf32>
    %7 = vector.broadcast %6 : vector<32x1xf32> to vector<32x128xf32>
    %8 = arith.addf %5, %7 : vector<32x128xf32>
    %cst_8 = arith.constant 0.000000e+00 : f32
    %9 = vector.broadcast %cst_8 : f32 to vector<32x128xf32>
    %10 = arith.maximumf %8, %9 : vector<32x128xf32>
    %c0_9 = arith.constant 0 : index
    %c0_10 = arith.constant 0 : index
    %11 = vector.load %arg4[%c0_9, %c0_10] : memref<32x32xbf16, #tpu.memory_space<vmem>>, vector<32x32xbf16>
    %12 = arith.truncf %10 : vector<32x128xf32> to vector<32x128xbf16>
    %cst_11 = arith.constant dense<0.000000e+00> : vector<32x128xf32>
    %13 = tpu.matmul %11, %12, %cst_11 {dimension_numbers = #tpu.dot_dimension_numbers<[1], [0], [0], [1], [0, 0, 1, 1], [], []>} : vector<32x32xbf16>, vector<32x128xbf16>, vector<32x128xf32> -> vector<32x128xf32>
    %14 = arith.truncf %13 : vector<32x128xf32> to vector<32x128xbf16>
    %cst_12 = arith.constant dense<0.000000e+00> : vector<32x128xf32>
    %15 = tpu.matmul %14, %0, %cst_12 {dimension_numbers = #tpu.dot_dimension_numbers<[1], [0], [0], [1], [0, 0, 1, 1], [], []>} : vector<32x128xbf16>, vector<128x128xbf16>, vector<32x128xf32> -> vector<32x128xf32>
    %c0_13 = arith.constant 0 : index
    %c0_14 = arith.constant 0 : index
    %16 = vector.load %arg5[%c0_13, %c0_14] : memref<32x1xf32, #tpu.memory_space<vmem>>, vector<32x1xf32>
    %17 = vector.broadcast %16 : vector<32x1xf32> to vector<32x128xf32>
    %18 = arith.addf %15, %17 : vector<32x128xf32>
    %cst_15 = arith.constant 0.000000e+00 : f32
    %19 = vector.broadcast %cst_15 : f32 to vector<32x128xf32>
    %20 = arith.maximumf %18, %19 : vector<32x128xf32>
    %21 = arith.truncf %20 : vector<32x128xf32> to vector<32x128xbf16>
    %c0_16 = arith.constant 0 : index
    %c0_17 = arith.constant 0 : index
    %22 = vector.load %arg6[%c0_16, %c0_17] : memref<32x128xbf16, #tpu.memory_space<vmem>>, vector<32x128xbf16>
    tpu.vector_store %arg6[%c0_16, %c0_17], %21 {strides = array<i32>} : memref<32x128xbf16, #tpu.memory_space<vmem>>, vector<32x128xbf16>,
    return
  }
}

</mosaic_0001>

<llo_original>
// kernel: tpu_custom_call.1
$region0: #{tpu_custom_call.1}
  #allocation0 [shape = 'u32[]', space=smem, size = 0x4, offset = 0x4, fixed_abs, tag = 'smem constant byte address 0x4 - core index']
  #allocation1 [shape = 'u32[144,128]{1,0:T(1,128)}', space=vmem, size = 0x12000, scoped, tag = 'internal scratch']
  %s0 = inlined_call_operand.vmem [shape: bf16[128,128], index: 0, kind: input, shape index: {}]
  %s1 = inlined_call_operand.vmem [shape: bf16[8,128], index: 1, kind: input, shape index: {}]
  %s2 = inlined_call_operand.vmem [shape: bf16[32,8], index: 2, kind: input, shape index: {}]
  %s3 = inlined_call_operand.vmem [shape: f32[32,1], index: 3, kind: input, shape index: {}]
  %s4 = inlined_call_operand.vmem [shape: bf16[32,32], index: 4, kind: input, shape index: {}]
  %s5 = inlined_call_operand.vmem [shape: f32[32,1], index: 5, kind: input, shape index: {}]
  %s6 = inlined_call_operand.hbm [shape: bf16[32,128], index: 6, kind: output, shape index: {}]
  %s7 = sld [smem:[#allocation0]]
  $region34: #{tpu_custom_call.1} parent=0
    _
  %s9 = ssub.s32 1, %s7
  %s10 = scalar_select 0, %s9, %s7
  $region1: #{tpu_custom_call.1} parent=0
    #allocation2 [shape = 'u8[8192]{0}', space=vmem, size = 0x2000, scoped, tag = 'output window, operand 0, single buffered']
    #allocation3 [shape = 's32[1]{0}', space=sflag, size = 0x4, scoped, tag = 'scoped memory for tpu_custom_call.1']
    %11 = vsyncpa [#allocation3], 0
    // Predicated region
    $region2: #{tpu_custom_call.1} parent=1 // pred_check
      _
    $region3: #{tpu_custom_call.1} parent=1 // pred_check_branch
      %13 = sbr.rel (0) target = $region5
    $region4: #{tpu_custom_call.1} parent=1 // pred_region
      _
    $region5: #{tpu_custom_call.1} parent=1 // pred_fallthru
      _
    // Predicated region
    $region6: #{tpu_custom_call.1} parent=1 // pred_check
      _
    $region7: #{tpu_custom_call.1} parent=1 // pred_check_branch
      %15 = sbr.rel (0) target = $region9
    $region8: #{tpu_custom_call.1} parent=1 // pred_region
      _
    $region9: #{tpu_custom_call.1} parent=1 // pred_fallthru
      _
    // Predicated region
    $region10: #{tpu_custom_call.1} parent=1 // pred_check
      _
    $region11: #{tpu_custom_call.1} parent=1 // pred_check_branch
      %17 = sbr.rel (0) target = $region13
    $region12: #{tpu_custom_call.1} parent=1 // pred_region
      _
    $region13: #{tpu_custom_call.1} parent=1 // pred_fallthru
      _
    // Predicated region
    $region14: #{tpu_custom_call.1} parent=1 // pred_check
      _
    $region15: #{tpu_custom_call.1} parent=1 // pred_check_branch
      %19 = sbr.rel (0) target = $region17
    $region16: #{tpu_custom_call.1} parent=1 // pred_region
      _
    $region17: #{tpu_custom_call.1} parent=1 // pred_fallthru
      _
    // Predicated region
    $region18: #{tpu_custom_call.1} parent=1 // pred_check
      _
    $region19: #{tpu_custom_call.1} parent=1 // pred_check_branch
      %21 = sbr.rel (0) target = $region21
    $region20: #{tpu_custom_call.1} parent=1 // pred_region
      _
    $region21: #{tpu_custom_call.1} parent=1 // pred_fallthru
      _
    // Predicated region
    $region22: #{tpu_custom_call.1} parent=1 // pred_check
      _
    $region23: #{tpu_custom_call.1} parent=1 // pred_check_branch
      %23 = sbr.rel (0) target = $region25
    $region24: #{tpu_custom_call.1} parent=1 // pred_region
      _
    $region25: #{tpu_custom_call.1} parent=1 // pred_fallthru
      _
    %v25 = vld [vmem:[%s0] sm:$0xf]
    %v26 = vld [vmem:[%s0 + $0x4] sm:$0xf]
    %v27 = vld [vmem:[%s0 + $0x8] sm:$0xf]
    %v28 = vld [vmem:[%s0 + $0xc] sm:$0xf]
    %v29 = vld [vmem:[%s0 + $0x10] sm:$0xf]
    %v30 = vld [vmem:[%s0 + $0x14] sm:$0xf]
    %v31 = vld [vmem:[%s0 + $0x18] sm:$0xf]
    %v32 = vld [vmem:[%s0 + $0x1c] sm:$0xf]
    %v33 = vld [vmem:[%s0 + $0x20] sm:$0xf]
    %v34 = vld [vmem:[%s0 + $0x24] sm:$0xf]
    %v35 = vld [vmem:[%s0 + $0x28] sm:$0xf]
    %v36 = vld [vmem:[%s0 + $0x2c] sm:$0xf]
    %v37 = vld [vmem:[%s0 + $0x30] sm:$0xf]
    %v38 = vld [vmem:[%s0 + $0x34] sm:$0xf]
    %v39 = vld [vmem:[%s0 + $0x38] sm:$0xf]
    %v40 = vld [vmem:[%s0 + $0x3c] sm:$0xf]
    %v41 = vld [vmem:[%s2] sm:$0xf]
    %v42 = vld [vmem:[%s2 + $0x4] sm:$0xf]
    %v43 = vld [vmem:[%s2 + $0x8] sm:$0xf]
    %v44 = vld [vmem:[%s2 + $0xc] sm:$0xf]
    %v45 = vld [vmem:[%s1] sm:$0xf]
    %v50 = vunpack.c.l.b16 %v41
    %v51 = vunpack.c.l.b16 %v42
    %v52 = vunpack.c.l.b16 %v43
    %v53 = vunpack.c.l.b16 %v44
    %v54 = vpack.c.b16 %v51, %v50
    %v55 = vpack.c.b16 %v53, %v52
    %vm56 = vcmask 64512
    %v58 = vsel %vm56, %v54, 0
    %v61 = vsel %vm56, %v55, 0
    %vm63 = vcmask 1043456
    %v65 = vsel %vm63, %v45, 0
    %67 = vmatprep.subr.bf16.mxu0 0
    %68 = vmatpush1.bf16.msra.mxu0 0
    %69 = vmatprep.subr.bf16.mxu0 0
    %70 = vmatpush1.bf16.msra.mxu0 0
    %71 = vmatprep.subr.bf16.mxu0 0
    %72 = vmatpush1.bf16.msra.mxu0 0
    %73 = vmatprep.subr.bf16.mxu0 0
    %74 = vmatpush1.bf16.msra.mxu0 0
    %75 = vmatprep.subr.bf16.mxu0 0
    %76 = vmatpush1.bf16.msra.mxu0 0
    %77 = vmatprep.subr.bf16.mxu0 0
    %78 = vmatpush1.bf16.msra.mxu0 0
    %79 = vmatprep.subr.bf16.mxu0 0
    %80 = vmatpush1.bf16.msra.mxu0 0
    %81 = vmatprep.subr.bf16.mxu0 0
    %82 = vmatpush1.bf16.msra.mxu0 %v65
    %83 = vmatprep.subr.bf16.mxu0 0
    %84 = vmatpush2.bf16.msra.mxu0 0
    %85 = vmatprep.subr.bf16.mxu0 0
    %86 = vmatpush2.bf16.msra.mxu0 0
    %87 = vmatprep.subr.bf16.mxu0 0
    %88 = vmatpush2.bf16.msra.mxu0 0
    %89 = vmatprep.subr.bf16.mxu0 0
    %90 = vmatpush2.bf16.msra.mxu0 0
    %91 = vmatprep.subr.bf16.mxu0 0
    %92 = vmatpush2.bf16.msra.mxu0 0
    %93 = vmatprep.subr.bf16.mxu0 0
    %94 = vmatpush2.bf16.msra.mxu0 0
    %95 = vmatprep.subr.bf16.mxu0 0
    %96 = vmatpush2.bf16.msra.mxu0 0
    %97 = vmatprep.subr.bf16.mxu0 0
    %98 = vmatpush2.bf16.msra.mxu0 0
    %99 = vmatprep.mubr.bf16.mxu0 0
    %100 = vmatmul.mubr.bf16.gmra.mxu0 %v58
    %v101 = vpop.f32.mrf.mxu0
    %v102 = vadd.f32 0.0, %v101
    %v103 = vpop.f32.mrf.mxu0
    %v104 = vpop.f32.mrf.mxu0
    %v105 = vadd.f32 0.0, %v104
    %v106 = vpop.f32.mrf.mxu0
    %107 = vmatprep.mubr.bf16.mxu0 0
    %108 = vmatmul.mubr.bf16.gmra.mxu0 %v61
    %v109 = vpop.f32.mrf.mxu0
    %v110 = vadd.f32 0.0, %v109
    %v111 = vpop.f32.mrf.mxu0
    %v112 = vpop.f32.mrf.mxu0
    %v113 = vadd.f32 0.0, %v112
    %v114 = vpop.f32.mrf.mxu0
    %115 = vdwg.mxu0
    %v116 = vpack.c.bf16 %v105, %v102
    %v117 = vpack.c.bf16 %v113, %v110
    %v118 = vld [vmem:[%s3] sm:$0xff]
    %v119 = vld [vmem:[%s3 + $0x8] sm:$0xff]
    %v120 = vld [vmem:[%s3 + $0x10] sm:$0xff]
    %v121 = vld [vmem:[%s3 + $0x18] sm:$0xff]
    %123 = vset.pattern.permute.xlu0 0
    %124 = vperm.xlu0 %123, %v118
    %v125 = vpop.permute.xlu0 %124
    %128 = vset.pattern.permute.xlu0 0
    %129 = vperm.xlu0 %128, %v119
    %v130 = vpop.permute.xlu0 %129
    %133 = vset.pattern.permute.xlu0 0
    %134 = vperm.xlu0 %133, %v120
    %v135 = vpop.permute.xlu0 %134
    %138 = vset.pattern.permute.xlu0 0
    %139 = vperm.xlu0 %138, %v121
    %v140 = vpop.permute.xlu0 %139
    %v158 = vunpack.c.l.b16 %v25
    %v159 = vunpack.c.l.b16 %v26
    %v160 = vunpack.c.l.b16 %v27
    %v161 = vunpack.c.l.b16 %v28
    %v162 = vunpack.c.l.b16 %v29
    %v163 = vunpack.c.l.b16 %v30
    %v164 = vunpack.c.l.b16 %v31
    %v165 = vunpack.c.l.b16 %v32
    %v166 = vunpack.c.l.b16 %v33
    %v167 = vunpack.c.l.b16 %v34
    %v168 = vunpack.c.l.b16 %v35
    %v169 = vunpack.c.l.b16 %v36
    %v170 = vunpack.c.l.b16 %v37
    %v171 = vunpack.c.l.b16 %v38
    %v172 = vunpack.c.l.b16 %v39
    %v173 = vunpack.c.l.b16 %v40
    %v174 = vpack.c.b16 %v159, %v158
    %v175 = vpack.c.b16 %v161, %v160
    %v176 = vpack.c.b16 %v163, %v162
    %v177 = vpack.c.b16 %v165, %v164
    %v178 = vpack.c.b16 %v167, %v166
    %v179 = vpack.c.b16 %v169, %v168
    %v180 = vpack.c.b16 %v171, %v170
    %v181 = vpack.c.b16 %v173, %v172
    %190 = vmatprep.subr.bf16.mxu0 0
    %191 = vmatpush1.bf16.msra.mxu0 %v181
    %192 = vmatprep.subr.bf16.mxu0 0
    %193 = vmatpush1.bf16.msra.mxu0 %v180
    %194 = vmatprep.subr.bf16.mxu0 0
    %195 = vmatpush1.bf16.msra.mxu0 %v179
    %196 = vmatprep.subr.bf16.mxu0 0
    %197 = vmatpush1.bf16.msra.mxu0 %v178
    %198 = vmatprep.subr.bf16.mxu0 0
    %199 = vmatpush1.bf16.msra.mxu0 %v177
    %200 = vmatprep.subr.bf16.mxu0 0
    %201 = vmatpush1.bf16.msra.mxu0 %v176
    %202 = vmatprep.subr.bf16.mxu0 0
    %203 = vmatpush1.bf16.msra.mxu0 %v175
    %204 = vmatprep.subr.bf16.mxu0 0
    %205 = vmatpush1.bf16.msra.mxu0 %v174
    %206 = vmatprep.subr.bf16.mxu0 0
    %207 = vmatpush2.bf16.msra.mxu0 0
    %208 = vmatprep.subr.bf16.mxu0 0
    %209 = vmatpush2.bf16.msra.mxu0 0
    %210 = vmatprep.subr.bf16.mxu0 0
    %211 = vmatpush2.bf16.msra.mxu0 0
    %212 = vmatprep.subr.bf16.mxu0 0
    %213 = vmatpush2.bf16.msra.mxu0 0
    %214 = vmatprep.subr.bf16.mxu0 0
    %215 = vmatpush2.bf16.msra.mxu0 0
    %216 = vmatprep.subr.bf16.mxu0 0
    %217 = vmatpush2.bf16.msra.mxu0 0
    %218 = vmatprep.subr.bf16.mxu0 0
    %219 = vmatpush2.bf16.msra.mxu0 0
    %220 = vmatprep.subr.bf16.mxu0 0
    %221 = vmatpush2.bf16.msra.mxu0 0
    %222 = vmatprep.mubr.bf16.mxu0 0
    %223 = vmatmul.mubr.bf16.gmra.mxu0 %v116
    %v224 = vpop.f32.mrf.mxu0
    %v225 = vadd.f32 %v125, %v224
    %v226 = vpop.f32.mrf.mxu0
    %v227 = vpop.f32.mrf.mxu0
    %v228 = vadd.f32 %v130, %v227
    %v229 = vpop.f32.mrf.mxu0
    %230 = vmatprep.mubr.bf16.mxu0 0
    %231 = vmatmul.mubr.bf16.gmra.mxu0 %v117
    %v232 = vpop.f32.mrf.mxu0
    %v233 = vadd.f32 %v135, %v232
    %v234 = vpop.f32.mrf.mxu0
    %v235 = vpop.f32.mrf.mxu0
    %v236 = vadd.f32 %v140, %v235
    %v237 = vpop.f32.mrf.mxu0
    %238 = vdwg.mxu0
    %v239 = vmax.f32 %v225, 0.0
    %v240 = vmax.f32 %v228, 0.0
    %v241 = vmax.f32 %v233, 0.0
    %v242 = vmax.f32 %v236, 0.0
    %v243 = vld [vmem:[%s4] sm:$0xf]
    %v244 = vld [vmem:[%s4 + $0x4] sm:$0xf]
    %v245 = vld [vmem:[%s4 + $0x8] sm:$0xf]
    %v246 = vld [vmem:[%s4 + $0xc] sm:$0xf]
    %v247 = vpack.c.bf16 %v240, %v239
    %v248 = vpack.c.bf16 %v242, %v241
    %v253 = vunpack.c.l.b16 %v243
    %v254 = vunpack.c.l.b16 %v244
    %v255 = vunpack.c.l.b16 %v245
    %v256 = vunpack.c.l.b16 %v246
    %v257 = vpack.c.b16 %v254, %v253
    %v258 = vpack.c.b16 %v256, %v255
    %vm259 = vcmask 261120
    %v261 = vsel %vm259, %v257, 0
    %v264 = vsel %vm259, %v258, 0
    %266 = vmatprep.subr.bf16.mxu0 0
    %267 = vmatpush1.bf16.msra.mxu0 0
    %268 = vmatprep.subr.bf16.mxu0 0
    %269 = vmatpush1.bf16.msra.mxu0 0
    %270 = vmatprep.subr.bf16.mxu0 0
    %271 = vmatpush1.bf16.msra.mxu0 0
    %272 = vmatprep.subr.bf16.mxu0 0
    %273 = vmatpush1.bf16.msra.mxu0 0
    %274 = vmatprep.subr.bf16.mxu0 0
    %275 = vmatpush1.bf16.msra.mxu0 0
    %276 = vmatprep.subr.bf16.mxu0 0
    %277 = vmatpush1.bf16.msra.mxu0 0
    %278 = vmatprep.subr.bf16.mxu0 0
    %279 = vmatpush1.bf16.msra.mxu0 %v248
    %280 = vmatprep.subr.bf16.mxu0 0
    %281 = vmatpush1.bf16.msra.mxu0 %v247
    %282 = vmatprep.subr.bf16.mxu0 0
    %283 = vmatpush2.bf16.msra.mxu0 0
    %284 = vmatprep.subr.bf16.mxu0 0
    %285 = vmatpush2.bf16.msra.mxu0 0
    %286 = vmatprep.subr.bf16.mxu0 0
    %287 = vmatpush2.bf16.msra.mxu0 0
    %288 = vmatprep.subr.bf16.mxu0 0
    %289 = vmatpush2.bf16.msra.mxu0 0
    %290 = vmatprep.subr.bf16.mxu0 0
    %291 = vmatpush2.bf16.msra.mxu0 0
    %292 = vmatprep.subr.bf16.mxu0 0
    %293 = vmatpush2.bf16.msra.mxu0 0
    %294 = vmatprep.subr.bf16.mxu0 0
    %295 = vmatpush2.bf16.msra.mxu0 0
    %296 = vmatprep.subr.bf16.mxu0 0
    %297 = vmatpush2.bf16.msra.mxu0 0
    %298 = vmatprep.mubr.bf16.mxu0 0
    %299 = vmatmul.mubr.bf16.gmra.mxu0 %v261
    %v300 = vpop.f32.mrf.mxu0
    %v301 = vadd.f32 0.0, %v300
    %v302 = vpop.f32.mrf.mxu0
    %v303 = vpop.f32.mrf.mxu0
    %v304 = vadd.f32 0.0, %v303
    %v305 = vpop.f32.mrf.mxu0
    %306 = vmatprep.mubr.bf16.mxu0 0
    %307 = vmatmul.mubr.bf16.gmra.mxu0 %v264
    %v308 = vpop.f32.mrf.mxu0
    %v309 = vadd.f32 0.0, %v308
    %v310 = vpop.f32.mrf.mxu0
    %v311 = vpop.f32.mrf.mxu0
    %v312 = vadd.f32 0.0, %v311
    %v313 = vpop.f32.mrf.mxu0
    %314 = vdwg.mxu0
    %v315 = vpack.c.bf16 %v304, %v301
    %v316 = vpack.c.bf16 %v312, %v309
    %v317 = vld [vmem:[%s5] sm:$0xff]
    %v318 = vld [vmem:[%s5 + $0x8] sm:$0xff]
    %v319 = vld [vmem:[%s5 + $0x10] sm:$0xff]
    %v320 = vld [vmem:[%s5 + $0x18] sm:$0xff]
    %322 = vset.pattern.permute.xlu0 0
    %323 = vperm.xlu0 %322, %v317
    %v324 = vpop.permute.xlu0 %323
    %327 = vset.pattern.permute.xlu0 0
    %328 = vperm.xlu0 %327, %v318
    %v329 = vpop.permute.xlu0 %328
    %332 = vset.pattern.permute.xlu0 0
    %333 = vperm.xlu0 %332, %v319
    %v334 = vpop.permute.xlu0 %333
    %337 = vset.pattern.permute.xlu0 0
    %338 = vperm.xlu0 %337, %v320
    %v339 = vpop.permute.xlu0 %338
    %341 = vmatprep.subr.bf16.mxu0 0
    %342 = vmatpush1.bf16.msra.mxu0 %v181
    %343 = vmatprep.subr.bf16.mxu0 0
    %344 = vmatpush1.bf16.msra.mxu0 %v180
    %345 = vmatprep.subr.bf16.mxu0 0
    %346 = vmatpush1.bf16.msra.mxu0 %v179
    %347 = vmatprep.subr.bf16.mxu0 0
    %348 = vmatpush1.bf16.msra.mxu0 %v178
    %349 = vmatprep.subr.bf16.mxu0 0
    %350 = vmatpush1.bf16.msra.mxu0 %v177
    %351 = vmatprep.subr.bf16.mxu0 0
    %352 = vmatpush1.bf16.msra.mxu0 %v176
    %353 = vmatprep.subr.bf16.mxu0 0
    %354 = vmatpush1.bf16.msra.mxu0 %v175
    %355 = vmatprep.subr.bf16.mxu0 0
    %356 = vmatpush1.bf16.msra.mxu0 %v174
    %357 = vmatprep.subr.bf16.mxu0 0
    %358 = vmatpush2.bf16.msra.mxu0 0
    %359 = vmatprep.subr.bf16.mxu0 0
    %360 = vmatpush2.bf16.msra.mxu0 0
    %361 = vmatprep.subr.bf16.mxu0 0
    %362 = vmatpush2.bf16.msra.mxu0 0
    %363 = vmatprep.subr.bf16.mxu0 0
    %364 = vmatpush2.bf16.msra.mxu0 0
    %365 = vmatprep.subr.bf16.mxu0 0
    %366 = vmatpush2.bf16.msra.mxu0 0
    %367 = vmatprep.subr.bf16.mxu0 0
    %368 = vmatpush2.bf16.msra.mxu0 0
    %369 = vmatprep.subr.bf16.mxu0 0
    %370 = vmatpush2.bf16.msra.mxu0 0
    %371 = vmatprep.subr.bf16.mxu0 0
    %372 = vmatpush2.bf16.msra.mxu0 0
    %373 = vmatprep.mubr.bf16.mxu0 0
    %374 = vmatmul.mubr.bf16.gmra.mxu0 %v315
    %v375 = vpop.f32.mrf.mxu0
    %v376 = vadd.f32 %v324, %v375
    %v377 = vpop.f32.mrf.mxu0
    %v378 = vpop.f32.mrf.mxu0
    %v379 = vadd.f32 %v329, %v378
    %v380 = vpop.f32.mrf.mxu0
    %381 = vmatprep.mubr.bf16.mxu0 0
    %382 = vmatmul.mubr.bf16.gmra.mxu0 %v316
    %v383 = vpop.f32.mrf.mxu0
    %v384 = vadd.f32 %v334, %v383
    %v385 = vpop.f32.mrf.mxu0
    %v386 = vpop.f32.mrf.mxu0
    %v387 = vadd.f32 %v339, %v386
    %v388 = vpop.f32.mrf.mxu0
    %389 = vdwg.mxu0
    %v390 = vmax.f32 %v376, 0.0
    %v391 = vmax.f32 %v379, 0.0
    %v392 = vmax.f32 %v384, 0.0
    %v393 = vmax.f32 %v387, 0.0
    %v394 = vpack.c.bf16 %v391, %v390
    %v395 = vpack.c.bf16 %v393, %v392
    %v398 = vunpack.c.l.b16 %v394
    %v399 = vunpack.c.h.b16 %v394
    %v400 = vunpack.c.l.b16 %v395
    %v401 = vunpack.c.h.b16 %v395
    %v402 = vpack.c.b16 %v398, %v398
    %v403 = vpack.c.b16 %v399, %v399
    %v404 = vpack.c.b16 %v400, %v400
    %v405 = vpack.c.b16 %v401, %v401
    %410 = vst [vmem:[#allocation2] sm:$0xf] %v402
    %411 = vst [vmem:[#allocation2 + $0x4] sm:$0xf] %v403
    %412 = vst [vmem:[#allocation2 + $0x8] sm:$0xf] %v404
    %413 = vst [vmem:[#allocation2 + $0xc] sm:$0xf] %v405
    // Predicated region
    $region26: #{tpu_custom_call.1} parent=1 // pred_check
      _
    $region27: #{tpu_custom_call.1} parent=1 // pred_check_branch
      %415 = sbr.rel (0) target = $region29
    $region28: #{tpu_custom_call.1} parent=1 // pred_region
      %s417 = ssub.s32 256, 256
      %418 = vsyncadd [#allocation3], %s417
      %s419 = sshll.u32 [#allocation2], 4
      %s420 = int_to_ptr.vmem [resolvable:$true] %s419
      %425 = dma.vmem_to_hbm [thread:$0]  %s420, 256, %s6, [#allocation3], 64, 64, 4
    $region29: #{tpu_custom_call.1} parent=1 // pred_fallthru
      _
    // Predicated region
    $region30: #{tpu_custom_call.1} parent=1 // pred_check
      _
    $region31: #{tpu_custom_call.1} parent=1 // pred_check_branch
      %427 = sbr.rel (0) target = $region33
    $region32: #{tpu_custom_call.1} parent=1 // pred_region
      %428 = dma.done [#allocation3], 256
    $region33: #{tpu_custom_call.1} parent=1 // pred_fallthru
      _
    %429 = vsyncpa [#allocation3], 1

</llo_original>
